<compile_context>
chip_gen: v7x
topology: tpu7x:2x2x1
jax: 0.10.0
libtpu: 0.0.40
codegen_flags: <defaults>
</compile_context>

<pallas_src>
import jax
import jax.numpy as jnp
from jax.experimental import pallas as pl
from jax.experimental.pallas import tpu as pltpu


def _lca_kernel(x_ref, w1t_ref, w2t_ref, o_ref):
    # x_ref  : (Bt, C, HW)  Bt batch elements' flattened feature maps
    # w1t_ref: (C, Cr)      first 1x1 conv weight, pre-transposed
    # w2t_ref: (Cr, C)      second 1x1 conv weight, pre-transposed
    x = x_ref[...]                                              # native dtype
    hw = x.shape[-1]

    # AdaptiveAvgPool2d(1): f32-accumulated spatial mean -> (Bt, C)
    pooled = jnp.sum(x, axis=-1, dtype=jnp.float32) * jnp.float32(1.0 / hw)

    # 1x1 conv (C -> Cr), ReLU, 1x1 conv (Cr -> C), Sigmoid -- all tiny, f32
    h = jnp.dot(pooled, w1t_ref[...], preferred_element_type=jnp.float32)
    h = jnp.maximum(h, 0.0)                                     # (Bt, Cr)
    y = jnp.dot(h, w2t_ref[...], preferred_element_type=jnp.float32)
    y = jax.nn.sigmoid(y)                                       # (Bt, C)

    # Channel-wise rescale; cast the gate (not the tile) so the store stays
    # in the input dtype.
    o_ref[...] = (x * y.astype(x.dtype)[:, :, None]).astype(o_ref.dtype)


def _pick_batch_tile(B, per_batch_bytes, target_bytes=2 << 20):
    """Largest divisor Bt of B with Bt*per_batch_bytes <= target (>=1).
    Prefer >= 2 grid steps (v7x megacore) when blocks stay >= 512 KiB."""
    divisors = [d for d in range(1, B + 1) if B % d == 0]
    fitting = [d for d in divisors if d * per_batch_bytes <= target_bytes]
    bt = max(fitting) if fitting else 1
    if B // bt < 2:
        smaller = [d for d in fitting if d < bt and d * per_batch_bytes >= (512 << 10)]
        if smaller:
            bt = max(smaller)
    return bt


def light_channel_attention(x, w1, w2):
    """x: (B, C, H, W); w1: (Cr, C) (conv1 weight squeezed); w2: (C, Cr).
    Returns x * sigmoid(conv2(relu(conv1(avgpool(x))))) in NCHW."""
    B, C, H, W = x.shape
    HW = H * W
    Cr = w1.shape[0]
    x_flat = x.reshape(B, C, HW)

    # Pre-transpose the tiny gate weights once in the wrapper (keeps the MXU
    # feed path clean; no in-kernel transpose/relayout).
    w1t = jnp.asarray(w1).T            # (C, Cr)
    w2t = jnp.asarray(w2).T            # (Cr, C)

    itemsize = jnp.dtype(x.dtype).itemsize
    Bt = _pick_batch_tile(B, C * HW * itemsize)
    grid = (B // Bt,)

    # Note: input_output_aliases={0: 0} would halve peak HBM footprint (the op
    # rescales x in place) but donates x; skipped here to keep the demo's x
    # alive for the reference check.
    out_flat = pl.pallas_call(
        _lca_kernel,
        out_shape=jax.ShapeDtypeStruct((B, C, HW), x.dtype),
        grid_spec=pltpu.PrefetchScalarGridSpec(
            num_scalar_prefetch=0,
            grid=grid,
            in_specs=[
                pl.BlockSpec((Bt, C, HW), lambda b: (b, 0, 0)),  # feature tile
                pl.BlockSpec((C, Cr), lambda b: (0, 0)),          # w1.T
                pl.BlockSpec((Cr, C), lambda b: (0, 0)),          # w2.T
            ],
            out_specs=pl.BlockSpec((Bt, C, HW), lambda b: (b, 0, 0)),
        ),
        compiler_params=pltpu.CompilerParams(
            dimension_semantics=("parallel",),
            # Explicit scoped-VMEM budget: double-buffered (in + out) 2 MiB
            # blocks + weights fit comfortably on v5e/v6e/v7x.
            vmem_limit_bytes=32 << 20,
        ),
    )(x_flat, w1t, w2t)

    return out_flat.reshape(B, C, H, W)


def _reference(x, w1, w2):
    # Pure-JAX reference of the PyTorch forward (NCHW).
    pooled = jnp.mean(x, axis=(2, 3))                       # (B, C)
    h = jnp.maximum(pooled @ w1.T, 0.0)                     # (B, Cr)
    y = jax.nn.sigmoid(h @ w2.T)                            # (B, C)
    return x * y[:, :, None, None]


if __name__ == "__main__":
    # Shapes consistent with the module: in_channels=16, reduction=8 -> Cr=2.
    B, C, H, W = 2, 16, 16, 16
    reduction = 8
    Cr = C // reduction

    key = jax.random.PRNGKey(0)
    kx, k1, k2 = jax.random.split(key, 3)
    x = jax.random.normal(kx, (B, C, H, W), dtype=jnp.float32)
    # Deterministic synthetic weights; shapes match nn.Conv2d(..., 1, bias=False)
    # with the trailing 1x1 dims squeezed.
    w1 = jax.random.normal(k1, (Cr, C), dtype=jnp.float32) * 0.1
    w2 = jax.random.normal(k2, (C, Cr), dtype=jnp.float32) * 0.1

    out = light_channel_attention(x, w1, w2)
    out = jax.block_until_ready(out)

    ref = _reference(x, w1, w2)
    assert out.shape == (B, C, H, W)
    assert jnp.allclose(out, ref, atol=1e-5, rtol=1e-5), "mismatch vs reference"

    print("KERNEL_OK")
</pallas_src>

<mosaic_0001>
module attributes {stable_mosaic.version = 11 : i64} {
  func.func @_lca_kernel(%arg0: i32, %arg1: memref<2x16x256xf32, #tpu.memory_space<vmem>>, %arg2: memref<16x2xf32, #tpu.memory_space<vmem>>, %arg3: memref<2x16xf32, #tpu.memory_space<vmem>>, %arg4: memref<2x16x256xf32, #tpu.memory_space<vmem>>) attributes {dimension_semantics = [#tpu.dimension_semantics<parallel>], iteration_bounds = array<i64: 1>, scalar_prefetch = 0 : i64, scratch_operands = 0 : i64, tpu.core_type = #tpu.core_type<tc>, window_params = [{transform_indices = @transform_0, window_bounds = array<i64: 2, 16, 256>}, {pipeline_mode = #tpu.pipeline_mode<synchronous>, transform_indices = @transform_1, window_bounds = array<i64: 16, 2>}, {pipeline_mode = #tpu.pipeline_mode<synchronous>, transform_indices = @transform_2, window_bounds = array<i64: 2, 16>}, {transform_indices = @transform_3, window_bounds = array<i64: 2, 16, 256>}]} {
    %c0 = arith.constant 0 : index
    %c0_0 = arith.constant 0 : index
    %c0_1 = arith.constant 0 : index
    %0 = vector.load %arg1[%c0, %c0_0, %c0_1] : memref<2x16x256xf32, #tpu.memory_space<vmem>>, vector<2x16x256xf32>
    %cst = arith.constant dense<0.000000e+00> : vector<2x16xf32>
    %1 = vector.multi_reduction <add>, %0, %cst [2] : vector<2x16x256xf32> to vector<2x16xf32>
    %cst_2 = arith.constant 3.906250e-03 : f32
    %2 = vector.broadcast %cst_2 : f32 to vector<2x16xf32>
    %3 = arith.mulf %1, %2 : vector<2x16xf32>
    %c0_3 = arith.constant 0 : index
    %c0_4 = arith.constant 0 : index
    %4 = vector.load %arg2[%c0_3, %c0_4] : memref<16x2xf32, #tpu.memory_space<vmem>>, vector<16x2xf32>
    %cst_5 = arith.constant dense<0.000000e+00> : vector<2x2xf32>
    %5 = tpu.matmul %3, %4, %cst_5 {dimension_numbers = #tpu.dot_dimension_numbers<[1], [0], [0], [1], [0, 0, 1, 1], [], []>} : vector<2x16xf32>, vector<16x2xf32>, vector<2x2xf32> -> vector<2x2xf32>
    %cst_6 = arith.constant 0.000000e+00 : f32
    %6 = vector.broadcast %cst_6 : f32 to vector<2x2xf32>
    %7 = arith.maximumf %5, %6 : vector<2x2xf32>
    %c0_7 = arith.constant 0 : index
    %c0_8 = arith.constant 0 : index
    %8 = vector.load %arg3[%c0_7, %c0_8] : memref<2x16xf32, #tpu.memory_space<vmem>>, vector<2x16xf32>
    %cst_9 = arith.constant dense<0.000000e+00> : vector<2x16xf32>
    %9 = tpu.matmul %7, %8, %cst_9 {dimension_numbers = #tpu.dot_dimension_numbers<[1], [0], [0], [1], [0, 0, 1, 1], [], []>} : vector<2x2xf32>, vector<2x16xf32>, vector<2x16xf32> -> vector<2x16xf32>
    %10 = arith.negf %9 : vector<2x16xf32>
    %11 = math.exp %10 : vector<2x16xf32>
    %cst_10 = arith.constant 1.000000e+00 : f32
    %12 = vector.broadcast %cst_10 : f32 to vector<2x16xf32>
    %13 = arith.addf %12, %11 : vector<2x16xf32>
    %14 = arith.divf %12, %13 : vector<2x16xf32>
    %15 = vector.shape_cast %14 : vector<2x16xf32> to vector<2x16x1xf32>
    %16 = vector.broadcast %15 : vector<2x16x1xf32> to vector<2x16x256xf32>
    %17 = arith.mulf %0, %16 : vector<2x16x256xf32>
    %c0_11 = arith.constant 0 : index
    %c0_12 = arith.constant 0 : index
    %c0_13 = arith.constant 0 : index
    %18 = vector.load %arg4[%c0_11, %c0_12, %c0_13] : memref<2x16x256xf32, #tpu.memory_space<vmem>>, vector<2x16x256xf32>
    tpu.vector_store %arg4[%c0_11, %c0_12, %c0_13], %17 {strides = array<i32>} : memref<2x16x256xf32, #tpu.memory_space<vmem>>, vector<2x16x256xf32>,
    return
  }
  func.func @transform_0(%arg0: i32) -> (i32, i32, i32) {
    %c0_i32 = arith.constant 0 : i32
    %c0_i32_0 = arith.constant 0 : i32
    %c0_i32_1 = arith.constant 0 : i32
    return %arg0, %c0_i32, %c0_i32_0 : i32, i32, i32
  }
  func.func @transform_1(%arg0: i32) -> (i32, i32) {
    %c0_i32 = arith.constant 0 : i32
    %c0_i32_0 = arith.constant 0 : i32
    %c0_i32_1 = arith.constant 0 : i32
    return %c0_i32, %c0_i32_0 : i32, i32
  }
  func.func @transform_2(%arg0: i32) -> (i32, i32) {
    %c0_i32 = arith.constant 0 : i32
    %c0_i32_0 = arith.constant 0 : i32
    %c0_i32_1 = arith.constant 0 : i32
    return %c0_i32, %c0_i32_0 : i32, i32
  }
  func.func @transform_3(%arg0: i32) -> (i32, i32, i32) {
    %c0_i32 = arith.constant 0 : i32
    %c0_i32_0 = arith.constant 0 : i32
    %c0_i32_1 = arith.constant 0 : i32
    return %arg0, %c0_i32, %c0_i32_0 : i32, i32, i32
  }
}

</mosaic_0001>

<llo_original>
// kernel: tpu_custom_call.1
$region0: #{tpu_custom_call.1}
  #allocation0 [shape = 'u32[]', space=smem, size = 0x4, offset = 0x4, fixed_abs, tag = 'smem constant byte address 0x4 - core index']
  #allocation1 [shape = 'u32[144,128]{1,0:T(1,128)}', space=vmem, size = 0x12000, scoped, tag = 'internal scratch']
  %s0 = inlined_call_operand.hbm [shape: f32[2,16,256], index: 0, kind: input, shape index: {}]
  %s1 = inlined_call_operand.vmem [shape: f32[16,2], index: 1, kind: input, shape index: {}]
  %s2 = inlined_call_operand.vmem [shape: f32[2,16], index: 2, kind: input, shape index: {}]
  %s3 = inlined_call_operand.hbm [shape: f32[2,16,256], index: 3, kind: output, shape index: {}]
  %s4 = sld [smem:[#allocation0]]
  $region26: #{tpu_custom_call.1} parent=0
    _
  %s6 = ssub.s32 1, %s4
  %s7 = scalar_select 0, %s6, %s4
  $region1: #{tpu_custom_call.1} parent=0
    #allocation2 [shape = 'u8[32768]{0}', space=vmem, size = 0x8000, scoped, tag = 'input window, operand 0, single buffered']
    #allocation3 [shape = 's32[1]{0}', space=sflag, size = 0x4, scoped, tag = 'scoped memory for tpu_custom_call.1']
    #allocation4 [shape = 's32[1]{0}', space=sflag, size = 0x4, scoped, tag = 'scoped memory for tpu_custom_call.1']
    #allocation5 [shape = 'u8[32768]{0}', space=vmem, size = 0x8000, scoped, tag = 'output window, operand 0, single buffered']
    %8 = vsyncpa [#allocation3], 0
    %9 = vsyncpa [#allocation4], 0
    // Predicated region
    $region2: #{tpu_custom_call.1} parent=1 // pred_check
      _
    $region3: #{tpu_custom_call.1} parent=1 // pred_check_branch
      %11 = sbr.rel (0) target = $region5
    $region4: #{tpu_custom_call.1} parent=1 // pred_region
      %s13 = ssub.s32 1024, 1024
      %14 = vsyncadd [#allocation3], %s13
      %s15 = sshll.u32 [#allocation2], 4
      %s16 = int_to_ptr.vmem [resolvable:$true] %s15
      %21 = dma.hbm_to_vmem [thread:$0]  %s0, 1024, %s16, [#allocation3], 256, 256, 16
    $region5: #{tpu_custom_call.1} parent=1 // pred_fallthru
      _
    // Predicated region
    $region6: #{tpu_custom_call.1} parent=1 // pred_check
      _
    $region7: #{tpu_custom_call.1} parent=1 // pred_check_branch
      %23 = sbr.rel (0) target = $region9
    $region8: #{tpu_custom_call.1} parent=1 // pred_region
      _
    $region9: #{tpu_custom_call.1} parent=1 // pred_fallthru
      _
    // Predicated region
    $region10: #{tpu_custom_call.1} parent=1 // pred_check
      _
    $region11: #{tpu_custom_call.1} parent=1 // pred_check_branch
      %25 = sbr.rel (0) target = $region13
    $region12: #{tpu_custom_call.1} parent=1 // pred_region
      _
    $region13: #{tpu_custom_call.1} parent=1 // pred_fallthru
      _
    // Predicated region
    $region14: #{tpu_custom_call.1} parent=1 // pred_check
      _
    $region15: #{tpu_custom_call.1} parent=1 // pred_check_branch
      %27 = sbr.rel (0) target = $region17
    $region16: #{tpu_custom_call.1} parent=1 // pred_region
      %28 = dma.done [#allocation3], 1024
    $region17: #{tpu_custom_call.1} parent=1 // pred_fallthru
      _
    %v29 = vld [vmem:[#allocation2] sm:$0xff]
    %v30 = vld [vmem:[#allocation2 + $0x8] sm:$0xff]
    %v31 = vld [vmem:[#allocation2 + $0x10] sm:$0xff]
    %v32 = vld [vmem:[#allocation2 + $0x18] sm:$0xff]
    %v33 = vld [vmem:[#allocation2 + $0x20] sm:$0xff]
    %v34 = vld [vmem:[#allocation2 + $0x28] sm:$0xff]
    %v35 = vld [vmem:[#allocation2 + $0x30] sm:$0xff]
    %v36 = vld [vmem:[#allocation2 + $0x38] sm:$0xff]
    %v37 = vadd.f32 %v29, %v30
    %38 = vadd.xlane.f32.xlu0 %v37
    %v39 = vpop.xlane.xlu0 %38
    %v40 = vadd.f32 %v31, %v32
    %41 = vadd.xlane.f32.xlu0 %v40
    %v42 = vpop.xlane.xlu0 %41
    %v43 = vadd.f32 %v33, %v34
    %44 = vadd.xlane.f32.xlu0 %v43
    %v45 = vpop.xlane.xlu0 %44
    %v46 = vadd.f32 %v35, %v36
    %47 = vadd.xlane.f32.xlu0 %v46
    %v48 = vpop.xlane.xlu0 %47
    %v49 = vmul.f32 %v39, 0.00390625
    %v50 = vmul.f32 %v42, 0.00390625
    %v51 = vmul.f32 %v45, 0.00390625
    %v52 = vmul.f32 %v48, 0.00390625
    %v53 = vld [vmem:[%s1] sm:$0xff]
    %v54 = vld [vmem:[%s1 + $0x8] sm:$0xff]
    %v59 = vlaneseq
    %v60 = vand.u32 %v59, 127
    %v61 = vlaneseq
    %v62 = vshrl.u32 %v61, 7
    %v63 = vsub.s32 %v60, %v62
    %v64 = vrot.slane %v49, %v63
    %v65 = vadd.s32 %v60, 4294967288
    %v66 = vlaneseq
    %v67 = vshrl.u32 %v66, 7
    %v68 = vsub.s32 %v65, %v67
    %v69 = vrot.slane %v50, %v68
    %vm70 = vcmask 130112
    %v71 = vsel %vm70, %v69, %v64
    %v72 = vlaneseq
    %v73 = vshrl.u32 %v72, 7
    %v74 = vsub.s32 %v60, %v73
    %v75 = vrot.slane %v51, %v74
    %v76 = vlaneseq
    %v77 = vshrl.u32 %v76, 7
    %v78 = vsub.s32 %v65, %v77
    %v79 = vrot.slane %v52, %v78
    %v80 = vsel %vm70, %v79, %v75
    %vm81 = vcmask 1041409
    %v82 = vsel %vm81, %v80, %v71
    %vm83 = vcmask 130048
    %v84 = vsel %vm83, %v82, 0
    %86 = vmatprep.subr.mxu0 0.0
    %87 = vmatpush1.msra.mxu0 %v53
    %88 = vmatprep.subr.mxu0 0.0
    %89 = vmatpush1.msra.mxu0 %v54
    %90 = vmatprep.subr.mxu0 0.0
    %91 = vmatpush1.msra.mxu0 0.0
    %92 = vmatprep.subr.mxu0 0.0
    %93 = vmatpush1.msra.mxu0 0.0
    %94 = vmatprep.subr.mxu0 0.0
    %95 = vmatpush1.msra.mxu0 0.0
    %96 = vmatprep.subr.mxu0 0.0
    %97 = vmatpush1.msra.mxu0 0.0
    %98 = vmatprep.subr.mxu0 0.0
    %99 = vmatpush1.msra.mxu0 0.0
    %100 = vmatprep.subr.mxu0 0.0
    %101 = vmatpush1.msra.mxu0 0.0
    %102 = vmatprep.subr.mxu0 0.0
    %103 = vmatpush1.msra.mxu0 0.0
    %104 = vmatprep.subr.mxu0 0.0
    %105 = vmatpush1.msra.mxu0 0.0
    %106 = vmatprep.subr.mxu0 0.0
    %107 = vmatpush1.msra.mxu0 0.0
    %108 = vmatprep.subr.mxu0 0.0
    %109 = vmatpush1.msra.mxu0 0.0
    %110 = vmatprep.subr.mxu0 0.0
    %111 = vmatpush1.msra.mxu0 0.0
    %112 = vmatprep.subr.mxu0 0.0
    %113 = vmatpush1.msra.mxu0 0.0
    %114 = vmatprep.subr.mxu0 0.0
    %115 = vmatpush1.msra.mxu0 0.0
    %116 = vmatprep.subr.mxu0 0.0
    %117 = vmatpush1.msra.mxu0 0.0
    %118 = vmatprep.subr.mxu0 0.0
    %119 = vmatpush1.msra.mxu0 0.0
    %120 = vmatprep.subr.mxu0 0.0
    %121 = vmatpush1.msra.mxu0 0.0
    %122 = vmatprep.subr.mxu0 0.0
    %123 = vmatpush1.msra.mxu0 0.0
    %124 = vmatprep.subr.mxu0 0.0
    %125 = vmatpush1.msra.mxu0 0.0
    %126 = vmatprep.subr.mxu0 0.0
    %127 = vmatpush1.msra.mxu0 0.0
    %128 = vmatprep.subr.mxu0 0.0
    %129 = vmatpush1.msra.mxu0 0.0
    %130 = vmatprep.subr.mxu0 0.0
    %131 = vmatpush1.msra.mxu0 0.0
    %132 = vmatprep.subr.mxu0 0.0
    %133 = vmatpush1.msra.mxu0 0.0
    %134 = vmatprep.subr.mxu0 0.0
    %135 = vmatpush1.msra.mxu0 0.0
    %136 = vmatprep.subr.mxu0 0.0
    %137 = vmatpush1.msra.mxu0 0.0
    %138 = vmatprep.subr.mxu0 0.0
    %139 = vmatpush1.msra.mxu0 0.0
    %140 = vmatprep.subr.mxu0 0.0
    %141 = vmatpush1.msra.mxu0 0.0
    %142 = vmatprep.subr.mxu0 0.0
    %143 = vmatpush1.msra.mxu0 0.0
    %144 = vmatprep.subr.mxu0 0.0
    %145 = vmatpush1.msra.mxu0 0.0
    %146 = vmatprep.subr.mxu0 0.0
    %147 = vmatpush1.msra.mxu0 0.0
    %148 = vmatprep.subr.mxu0 0.0
    %149 = vmatpush1.msra.mxu0 0.0
    %150 = vmatprep.mubr.f32.mxu0 0.0
    %151 = vmatmul.mubr.f32.gmra.mrb[0].mxu0 %v84
    %v152 = vpop.f32.mrb[0].mxu0
    %v153 = vadd.f32 0.0, %v152
    %v154 = vpop.f32.mrb[0].mxu0
    %155 = vdwg.mxu0
    %v156 = vmax.f32 %v153, 0.0
    %v157 = vld [vmem:[%s2] sm:$0x3]
    %vm158 = vcmask 15360
    %v160 = vsel %vm158, %v156, 0
    %vm162 = vcmask 1041408
    %v164 = vsel %vm162, %v157, 0
    %166 = vmatprep.subr.mxu0 0.0
    %167 = vmatpush1.msra.mxu0 %v164
    %168 = vmatprep.subr.mxu0 0.0
    %169 = vmatpush1.msra.mxu0 0.0
    %170 = vmatprep.subr.mxu0 0.0
    %171 = vmatpush1.msra.mxu0 0.0
    %172 = vmatprep.subr.mxu0 0.0
    %173 = vmatpush1.msra.mxu0 0.0
    %174 = vmatprep.subr.mxu0 0.0
    %175 = vmatpush1.msra.mxu0 0.0
    %176 = vmatprep.subr.mxu0 0.0
    %177 = vmatpush1.msra.mxu0 0.0
    %178 = vmatprep.subr.mxu0 0.0
    %179 = vmatpush1.msra.mxu0 0.0
    %180 = vmatprep.subr.mxu0 0.0
    %181 = vmatpush1.msra.mxu0 0.0
    %182 = vmatprep.subr.mxu0 0.0
    %183 = vmatpush1.msra.mxu0 0.0
    %184 = vmatprep.subr.mxu0 0.0
    %185 = vmatpush1.msra.mxu0 0.0
    %186 = vmatprep.subr.mxu0 0.0
    %187 = vmatpush1.msra.mxu0 0.0
    %188 = vmatprep.subr.mxu0 0.0
    %189 = vmatpush1.msra.mxu0 0.0
    %190 = vmatprep.subr.mxu0 0.0
    %191 = vmatpush1.msra.mxu0 0.0
    %192 = vmatprep.subr.mxu0 0.0
    %193 = vmatpush1.msra.mxu0 0.0
    %194 = vmatprep.subr.mxu0 0.0
    %195 = vmatpush1.msra.mxu0 0.0
    %196 = vmatprep.subr.mxu0 0.0
    %197 = vmatpush1.msra.mxu0 0.0
    %198 = vmatprep.subr.mxu0 0.0
    %199 = vmatpush1.msra.mxu0 0.0
    %200 = vmatprep.subr.mxu0 0.0
    %201 = vmatpush1.msra.mxu0 0.0
    %202 = vmatprep.subr.mxu0 0.0
    %203 = vmatpush1.msra.mxu0 0.0
    %204 = vmatprep.subr.mxu0 0.0
    %205 = vmatpush1.msra.mxu0 0.0
    %206 = vmatprep.subr.mxu0 0.0
    %207 = vmatpush1.msra.mxu0 0.0
    %208 = vmatprep.subr.mxu0 0.0
    %209 = vmatpush1.msra.mxu0 0.0
    %210 = vmatprep.subr.mxu0 0.0
    %211 = vmatpush1.msra.mxu0 0.0
    %212 = vmatprep.subr.mxu0 0.0
    %213 = vmatpush1.msra.mxu0 0.0
    %214 = vmatprep.subr.mxu0 0.0
    %215 = vmatpush1.msra.mxu0 0.0
    %216 = vmatprep.subr.mxu0 0.0
    %217 = vmatpush1.msra.mxu0 0.0
    %218 = vmatprep.subr.mxu0 0.0
    %219 = vmatpush1.msra.mxu0 0.0
    %220 = vmatprep.subr.mxu0 0.0
    %221 = vmatpush1.msra.mxu0 0.0
    %222 = vmatprep.subr.mxu0 0.0
    %223 = vmatpush1.msra.mxu0 0.0
    %224 = vmatprep.subr.mxu0 0.0
    %225 = vmatpush1.msra.mxu0 0.0
    %226 = vmatprep.subr.mxu0 0.0
    %227 = vmatpush1.msra.mxu0 0.0
    %228 = vmatprep.subr.mxu0 0.0
    %229 = vmatpush1.msra.mxu0 0.0
    %230 = vmatprep.mubr.f32.mxu0 0.0
    %231 = vmatmul.mubr.f32.gmra.mrb[0].mxu0 %v160
    %v232 = vpop.f32.mrb[0].mxu0
    %v233 = vadd.f32 0.0, %v232
    %v234 = vpop.f32.mrb[0].mxu0
    %235 = vdwg.mxu0
    %v236 = vxor.u32 %v233, 2147483648
    %v237 = vmul.f32 %v236, 1.442695
    %v238 = vpow.pop %v237
    %v239 = vadd.f32 %v238, 1.0
    %v240 = vrcp.pop %v239
    %v241 = vmul.f32 1.0, %v240
    %v242 = vlaneseq
    %v243 = vshrl.u32 %v242, 7
    %v244 = vsub.s32 0, %v243
    %v245 = vrot.slane %v241, %v244
    %247 = vbcast.lane.b32.xlu0 %v245, 256
    %v248 = vpop.permute.xlu0 %247
    %s250 = sor.u32 256, 8
    %251 = vbcast.lane.b32.xlu0 %v245, %s250
    %v252 = vpop.permute.xlu0 %251
    %v253 = vlaneseq
    %v254 = vshrl.u32 %v253, 7
    %v255 = vsub.s32 1, %v254
    %v256 = vrot.slane %v241, %v255
    %258 = vbcast.lane.b32.xlu0 %v256, 256
    %v259 = vpop.permute.xlu0 %258
    %s261 = sor.u32 256, 8
    %262 = vbcast.lane.b32.xlu0 %v256, %s261
    %v263 = vpop.permute.xlu0 %262
    %v264 = vmul.f32 %v29, %v248
    %v265 = vmul.f32 %v30, %v248
    %v266 = vmul.f32 %v31, %v252
    %v267 = vmul.f32 %v32, %v252
    %v268 = vmul.f32 %v33, %v259
    %v269 = vmul.f32 %v34, %v259
    %v270 = vmul.f32 %v35, %v263
    %v271 = vmul.f32 %v36, %v263
    %272 = vst [vmem:[#allocation5] sm:$0xff] %v264
    %273 = vst [vmem:[#allocation5 + $0x8] sm:$0xff] %v265
    %274 = vst [vmem:[#allocation5 + $0x10] sm:$0xff] %v266
    %275 = vst [vmem:[#allocation5 + $0x18] sm:$0xff] %v267
    %276 = vst [vmem:[#allocation5 + $0x20] sm:$0xff] %v268
    %277 = vst [vmem:[#allocation5 + $0x28] sm:$0xff] %v269
    %278 = vst [vmem:[#allocation5 + $0x30] sm:$0xff] %v270
    %279 = vst [vmem:[#allocation5 + $0x38] sm:$0xff] %v271
    // Predicated region
    $region18: #{tpu_custom_call.1} parent=1 // pred_check
      _
    $region19: #{tpu_custom_call.1} parent=1 // pred_check_branch
      %281 = sbr.rel (0) target = $region21
    $region20: #{tpu_custom_call.1} parent=1 // pred_region
      %s283 = ssub.s32 1024, 1024
      %284 = vsyncadd [#allocation4], %s283
      %s285 = sshll.u32 [#allocation5], 4
      %s286 = int_to_ptr.vmem [resolvable:$true] %s285
      %291 = dma.vmem_to_hbm [thread:$0]  %s286, 1024, %s3, [#allocation4], 256, 256, 16
    $region21: #{tpu_custom_call.1} parent=1 // pred_fallthru
      _
    // Predicated region
    $region22: #{tpu_custom_call.1} parent=1 // pred_check
      _
    $region23: #{tpu_custom_call.1} parent=1 // pred_check_branch
      %293 = sbr.rel (0) target = $region25
    $region24: #{tpu_custom_call.1} parent=1 // pred_region
      %294 = dma.done [#allocation4], 1024
    $region25: #{tpu_custom_call.1} parent=1 // pred_fallthru
      _
    %295 = vsyncpa [#allocation3], 1
    %296 = vsyncpa [#allocation4], 1

</llo_original>
